<compile_context>
chip_gen: v7x
topology: tpu7x:2x2x1
jax: 0.10.0
libtpu: 0.0.40
codegen_flags: <defaults>
</compile_context>

<pallas_src>
import math

import jax
import jax.numpy as jnp
import numpy as np
from jax.experimental import pallas as pl
from jax.experimental.pallas import tpu as pltpu

STATE_DIM = 64
ACTION_DIM = 4
HEAD_DIM = 2 * ACTION_DIM              # fused [mean || log_std] head
HIDDEN_DIMS = (256, 256, 128)
INIT_STD = 0.3
MIN_STD = 0.01
MAX_STD = 2.0
LOG_MIN = math.log(MIN_STD)
LOG_MAX = math.log(MAX_STD)
LN_EPS = 1e-5                          # PyTorch nn.LayerNorm default
MAX_TILE_B = 512                       # >=512-row tiles: ~85% of HBM roofline, fits VMEM easily


def _round_up(x, m):
    return (x + m - 1) // m * m


def _ln_relu(h, gamma, beta):
    """LayerNorm fused with ReLU.

    Uses var = E[x^2] - mu^2 so the two cross-lane reductions are independent
    (overlapping XLU pushes) and folds gamma into the rsqrt factor.
    """
    inv_n = 1.0 / h.shape[-1]
    s1 = jnp.sum(h, axis=-1, keepdims=True)
    s2 = jnp.sum(h * h, axis=-1, keepdims=True)
    mu = s1 * inv_n
    var = jnp.maximum(s2 * inv_n - mu * mu, 0.0)
    scale = jax.lax.rsqrt(var + LN_EPS) * gamma
    return jnp.maximum(h * scale + (beta - mu * scale), 0.0)


def policy_kernel(x_ref, w1_ref, p1_ref, w2_ref, p2_ref, w3_ref, p3_ref,
                  wh_ref, bh_ref, out_ref):
    # x is bf16 (TILE_B, 64). All matmuls feed the MXU in bf16 with f32
    # accumulation; all VPU/EUP work (LayerNorm / ReLU / tanh / clamp) stays f32.
    # p*_ref rows: [0]=bias, [1]=LayerNorm gamma, [2]=LayerNorm beta.
    x = x_ref[...]

    # Layer 1 (dropout is identity at inference)
    h = jnp.dot(x, w1_ref[...], preferred_element_type=jnp.float32) + p1_ref[0:1, :]
    h = _ln_relu(h, p1_ref[1:2, :], p1_ref[2:3, :])

    # Layer 2
    h = jnp.dot(h.astype(jnp.bfloat16), w2_ref[...],
                preferred_element_type=jnp.float32) + p2_ref[0:1, :]
    h = _ln_relu(h, p2_ref[1:2, :], p2_ref[2:3, :])

    # Layer 3
    h = jnp.dot(h.astype(jnp.bfloat16), w3_ref[...],
                preferred_element_type=jnp.float32) + p3_ref[0:1, :]
    h = _ln_relu(h, p3_ref[1:2, :], p3_ref[2:3, :])

    # Fused heads: one (128, 8) matmul yields [mean || log_std].
    z = jnp.dot(h.astype(jnp.bfloat16), wh_ref[...],
                preferred_element_type=jnp.float32) + bh_ref[...]
    lane = jax.lax.broadcasted_iota(jnp.int32, z.shape, 1)
    out_ref[...] = jnp.where(lane < ACTION_DIM,
                             jnp.tanh(z),
                             jnp.clip(z, LOG_MIN, LOG_MAX))


@jax.jit
def continuous_policy_forward(state, params):
    """state: (B, STATE_DIM) float32 -> (mean (B, ACTION_DIM), log_std (B, ACTION_DIM))."""
    B = state.shape[0]
    d0, d1, d2, d3 = (STATE_DIM, *HIDDEN_DIMS)

    # Batch tiling: large tiles for DMA/compute pipelining, padded to a full tile.
    tile_b = min(MAX_TILE_B, _round_up(B, 8))
    b_pad = _round_up(B, tile_b)
    x = state.astype(jnp.bfloat16)
    if b_pad != B:
        x = jnp.pad(x, ((0, b_pad - B), (0, 0)))

    # Pack parameters: bf16 matmul weights; per-layer (3, dim) = [bias; gamma; beta].
    w1 = params["w1"].astype(jnp.bfloat16)
    w2 = params["w2"].astype(jnp.bfloat16)
    w3 = params["w3"].astype(jnp.bfloat16)
    wh = jnp.concatenate([params["wm"], params["ws"]], axis=1).astype(jnp.bfloat16)
    p1 = jnp.concatenate([params["b1"], params["g1"], params["be1"]], axis=0)
    p2 = jnp.concatenate([params["b2"], params["g2"], params["be2"]], axis=0)
    p3 = jnp.concatenate([params["b3"], params["g3"], params["be3"]], axis=0)
    bh = jnp.concatenate([params["bm"], params["bs"]], axis=1)

    const = lambda i: (0, 0)
    in_specs = [
        pl.BlockSpec((tile_b, d0), lambda i: (i, 0)),      # state tile
        pl.BlockSpec((d0, d1), const), pl.BlockSpec((3, d1), const),
        pl.BlockSpec((d1, d2), const), pl.BlockSpec((3, d2), const),
        pl.BlockSpec((d2, d3), const), pl.BlockSpec((3, d3), const),
        pl.BlockSpec((d3, HEAD_DIM), const), pl.BlockSpec((1, HEAD_DIM), const),
    ]
    out_specs = pl.BlockSpec((tile_b, HEAD_DIM), lambda i: (i, 0))

    wflops = d0 * d1 + d1 * d2 + d2 * d3 + d3 * HEAD_DIM
    cost = pl.CostEstimate(
        flops=2 * b_pad * wflops,
        transcendentals=b_pad * (3 + ACTION_DIM),          # 3 rsqrt + 4 tanh per row
        bytes_accessed=(2 * wflops                          # bf16 weights
                        + 4 * (3 * (d1 + d2 + d3) + HEAD_DIM)
                        + b_pad * (2 * d0 + 4 * HEAD_DIM)), # bf16 in, f32 out
    )

    out = pl.pallas_call(
        policy_kernel,
        out_shape=jax.ShapeDtypeStruct((b_pad, HEAD_DIM), jnp.float32),
        grid_spec=pltpu.PrefetchScalarGridSpec(
            num_scalar_prefetch=0,
            grid=(b_pad // tile_b,),
            in_specs=in_specs,
            out_specs=out_specs,
        ),
        compiler_params=pltpu.CompilerParams(dimension_semantics=("parallel",)),
        cost_estimate=cost,
    )(x, w1, p1, w2, p2, w3, p3, wh, bh)

    return out[:B, :ACTION_DIM], out[:B, ACTION_DIM:]


def init_params(key):
    """Deterministic parameter init mirroring _initialize_parameters():
    orthogonal (gain=1) weights + zero bias for feature extractor;
    orthogonal gain=0.01 for mean head; zeros weight + log(init_std) bias
    for log_std head; LayerNorm weight=1, bias=0."""
    keys = jax.random.split(key, 8)
    ortho1 = jax.nn.initializers.orthogonal(scale=1.0)
    ortho001 = jax.nn.initializers.orthogonal(scale=0.01)

    d0, d1, d2, d3 = (STATE_DIM, *HIDDEN_DIMS)

    params = {
        # weights stored as (in_dim, out_dim) so the kernel computes x @ W + b
        "w1": ortho1(keys[0], (d0, d1), jnp.float32),
        "b1": jnp.zeros((1, d1), jnp.float32),
        "g1": jnp.ones((1, d1), jnp.float32),
        "be1": jnp.zeros((1, d1), jnp.float32),
        "w2": ortho1(keys[1], (d1, d2), jnp.float32),
        "b2": jnp.zeros((1, d2), jnp.float32),
        "g2": jnp.ones((1, d2), jnp.float32),
        "be2": jnp.zeros((1, d2), jnp.float32),
        "w3": ortho1(keys[2], (d2, d3), jnp.float32),
        "b3": jnp.zeros((1, d3), jnp.float32),
        "g3": jnp.ones((1, d3), jnp.float32),
        "be3": jnp.zeros((1, d3), jnp.float32),
        "wm": ortho001(keys[3], (d3, ACTION_DIM), jnp.float32),
        "bm": jnp.zeros((1, ACTION_DIM), jnp.float32),
        "ws": jnp.zeros((d3, ACTION_DIM), jnp.float32),
        "bs": jnp.full((1, ACTION_DIM), math.log(INIT_STD), jnp.float32),
    }
    return params


def _layernorm_ref(h, gamma, beta):
    mu = jnp.mean(h, axis=-1, keepdims=True)
    var = jnp.mean((h - mu) * (h - mu), axis=-1, keepdims=True)
    return (h - mu) * jax.lax.rsqrt(var + LN_EPS) * gamma + beta


def reference_forward(state, p):
    """Pure-JAX f32 reference (PyTorch semantics) for correctness checking."""
    h = state @ p["w1"] + p["b1"]
    h = jnp.maximum(_layernorm_ref(h, p["g1"], p["be1"]), 0.0)
    h = h @ p["w2"] + p["b2"]
    h = jnp.maximum(_layernorm_ref(h, p["g2"], p["be2"]), 0.0)
    h = h @ p["w3"] + p["b3"]
    h = jnp.maximum(_layernorm_ref(h, p["g3"], p["be3"]), 0.0)
    mean = jnp.tanh(h @ p["wm"] + p["bm"])
    log_std = jnp.clip(h @ p["ws"] + p["bs"], LOG_MIN, LOG_MAX)
    return mean, log_std


if __name__ == "__main__":
    key = jax.random.PRNGKey(0)
    pkey, xkey = jax.random.split(key)

    params = init_params(pkey)
    batch = 8
    state = jax.random.normal(xkey, (batch, STATE_DIM), dtype=jnp.float32)

    mean, log_std = continuous_policy_forward(state, params)
    jax.block_until_ready((mean, log_std))

    ref_mean, ref_log_std = reference_forward(state, params)
    assert mean.shape == (batch, ACTION_DIM) and log_std.shape == (batch, ACTION_DIM)
    # bf16 MXU matmuls (f32 accumulation) vs. pure-f32 reference: expect ~1e-3-level drift.
    np.testing.assert_allclose(np.asarray(mean), np.asarray(ref_mean), rtol=5e-2, atol=2e-2)
    np.testing.assert_allclose(np.asarray(log_std), np.asarray(ref_log_std), rtol=5e-2, atol=2e-2)

    print("KERNEL_OK")
</pallas_src>

<mosaic_0001>
module attributes {stable_mosaic.version = 11 : i64} {
  func.func @policy_kernel(%arg0: i32, %arg1: memref<8x64xbf16, #tpu.memory_space<vmem>>, %arg2: memref<64x256xbf16, #tpu.memory_space<vmem>>, %arg3: memref<3x256xf32, #tpu.memory_space<vmem>>, %arg4: memref<256x256xbf16, #tpu.memory_space<vmem>>, %arg5: memref<3x256xf32, #tpu.memory_space<vmem>>, %arg6: memref<256x128xbf16, #tpu.memory_space<vmem>>, %arg7: memref<3x128xf32, #tpu.memory_space<vmem>>, %arg8: memref<128x8xbf16, #tpu.memory_space<vmem>>, %arg9: memref<1x8xf32, #tpu.memory_space<vmem>>, %arg10: memref<8x8xf32, #tpu.memory_space<vmem>>) attributes {dimension_semantics = [#tpu.dimension_semantics<parallel>], iteration_bounds = array<i64: 1>, scalar_prefetch = 0 : i64, scratch_operands = 0 : i64, tpu.core_type = #tpu.core_type<tc>, window_params = [{transform_indices = @transform_0, window_bounds = array<i64: 8, 64>}, {pipeline_mode = #tpu.pipeline_mode<synchronous>, transform_indices = @transform_1, window_bounds = array<i64: 64, 256>}, {pipeline_mode = #tpu.pipeline_mode<synchronous>, transform_indices = @transform_2, window_bounds = array<i64: 3, 256>}, {pipeline_mode = #tpu.pipeline_mode<synchronous>, transform_indices = @transform_3, window_bounds = array<i64: 256, 256>}, {pipeline_mode = #tpu.pipeline_mode<synchronous>, transform_indices = @transform_4, window_bounds = array<i64: 3, 256>}, {pipeline_mode = #tpu.pipeline_mode<synchronous>, transform_indices = @transform_5, window_bounds = array<i64: 256, 128>}, {pipeline_mode = #tpu.pipeline_mode<synchronous>, transform_indices = @transform_6, window_bounds = array<i64: 3, 128>}, {pipeline_mode = #tpu.pipeline_mode<synchronous>, transform_indices = @transform_7, window_bounds = array<i64: 128, 8>}, {pipeline_mode = #tpu.pipeline_mode<synchronous>, transform_indices = @transform_8, window_bounds = array<i64: 1, 8>}, {transform_indices = @transform_9, window_bounds = array<i64: 8, 8>}]} {
    %c0 = arith.constant 0 : index
    %c0_0 = arith.constant 0 : index
    %0 = vector.load %arg1[%c0, %c0_0] : memref<8x64xbf16, #tpu.memory_space<vmem>>, vector<8x64xbf16>
    %c0_1 = arith.constant 0 : index
    %c0_2 = arith.constant 0 : index
    %1 = vector.load %arg2[%c0_1, %c0_2] : memref<64x256xbf16, #tpu.memory_space<vmem>>, vector<64x256xbf16>
    %cst = arith.constant dense<0.000000e+00> : vector<8x256xf32>
    %2 = tpu.matmul %0, %1, %cst {dimension_numbers = #tpu.dot_dimension_numbers<[1], [0], [0], [1], [0, 0, 1, 1], [], []>} : vector<8x64xbf16>, vector<64x256xbf16>, vector<8x256xf32> -> vector<8x256xf32>
    %c0_3 = arith.constant 0 : index
    %c0_4 = arith.constant 0 : index
    %3 = vector.load %arg3[%c0_3, %c0_4] : memref<3x256xf32, #tpu.memory_space<vmem>>, vector<1x256xf32>
    %4 = vector.broadcast %3 : vector<1x256xf32> to vector<8x256xf32>
    %5 = arith.addf %2, %4 : vector<8x256xf32>
    %c1 = arith.constant 1 : index
    %c0_5 = arith.constant 0 : index
    %6 = vector.load %arg3[%c1, %c0_5] : memref<3x256xf32, #tpu.memory_space<vmem>>, vector<1x256xf32>
    %c2 = arith.constant 2 : index
    %c0_6 = arith.constant 0 : index
    %7 = vector.load %arg3[%c2, %c0_6] : memref<3x256xf32, #tpu.memory_space<vmem>>, vector<1x256xf32>
    %cst_7 = arith.constant dense<0.000000e+00> : vector<8xf32>
    %8 = vector.multi_reduction <add>, %5, %cst_7 [1] : vector<8x256xf32> to vector<8xf32>
    %9 = vector.shape_cast %8 : vector<8xf32> to vector<8x1xf32>
    %10 = arith.mulf %5, %5 : vector<8x256xf32>
    %cst_8 = arith.constant dense<0.000000e+00> : vector<8xf32>
    %11 = vector.multi_reduction <add>, %10, %cst_8 [1] : vector<8x256xf32> to vector<8xf32>
    %12 = vector.shape_cast %11 : vector<8xf32> to vector<8x1xf32>
    %cst_9 = arith.constant 3.906250e-03 : f32
    %13 = vector.broadcast %cst_9 : f32 to vector<8x1xf32>
    %14 = arith.mulf %9, %13 : vector<8x1xf32>
    %cst_10 = arith.constant 3.906250e-03 : f32
    %15 = vector.broadcast %cst_10 : f32 to vector<8x1xf32>
    %16 = arith.mulf %12, %15 : vector<8x1xf32>
    %17 = arith.mulf %14, %14 : vector<8x1xf32>
    %18 = arith.subf %16, %17 : vector<8x1xf32>
    %cst_11 = arith.constant 0.000000e+00 : f32
    %19 = vector.broadcast %cst_11 : f32 to vector<8x1xf32>
    %20 = arith.maximumf %18, %19 : vector<8x1xf32>
    %cst_12 = arith.constant 9.99999974E-6 : f32
    %21 = vector.broadcast %cst_12 : f32 to vector<8x1xf32>
    %22 = arith.addf %20, %21 : vector<8x1xf32>
    %23 = math.rsqrt %22 : vector<8x1xf32>
    %24 = vector.broadcast %23 : vector<8x1xf32> to vector<8x256xf32>
    %25 = vector.broadcast %6 : vector<1x256xf32> to vector<8x256xf32>
    %26 = arith.mulf %24, %25 : vector<8x256xf32>
    %27 = arith.mulf %5, %26 : vector<8x256xf32>
    %28 = vector.broadcast %14 : vector<8x1xf32> to vector<8x256xf32>
    %29 = arith.mulf %28, %26 : vector<8x256xf32>
    %30 = vector.broadcast %7 : vector<1x256xf32> to vector<8x256xf32>
    %31 = arith.subf %30, %29 : vector<8x256xf32>
    %32 = arith.addf %27, %31 : vector<8x256xf32>
    %cst_13 = arith.constant 0.000000e+00 : f32
    %33 = vector.broadcast %cst_13 : f32 to vector<8x256xf32>
    %34 = arith.maximumf %32, %33 : vector<8x256xf32>
    %35 = arith.truncf %34 : vector<8x256xf32> to vector<8x256xbf16>
    %c0_14 = arith.constant 0 : index
    %c0_15 = arith.constant 0 : index
    %36 = vector.load %arg4[%c0_14, %c0_15] : memref<256x256xbf16, #tpu.memory_space<vmem>>, vector<256x256xbf16>
    %cst_16 = arith.constant dense<0.000000e+00> : vector<8x256xf32>
    %37 = tpu.matmul %35, %36, %cst_16 {dimension_numbers = #tpu.dot_dimension_numbers<[1], [0], [0], [1], [0, 0, 1, 1], [], []>} : vector<8x256xbf16>, vector<256x256xbf16>, vector<8x256xf32> -> vector<8x256xf32>
    %c0_17 = arith.constant 0 : index
    %c0_18 = arith.constant 0 : index
    %38 = vector.load %arg5[%c0_17, %c0_18] : memref<3x256xf32, #tpu.memory_space<vmem>>, vector<1x256xf32>
    %39 = vector.broadcast %38 : vector<1x256xf32> to vector<8x256xf32>
    %40 = arith.addf %37, %39 : vector<8x256xf32>
    %c1_19 = arith.constant 1 : index
    %c0_20 = arith.constant 0 : index
    %41 = vector.load %arg5[%c1_19, %c0_20] : memref<3x256xf32, #tpu.memory_space<vmem>>, vector<1x256xf32>
    %c2_21 = arith.constant 2 : index
    %c0_22 = arith.constant 0 : index
    %42 = vector.load %arg5[%c2_21, %c0_22] : memref<3x256xf32, #tpu.memory_space<vmem>>, vector<1x256xf32>
    %cst_23 = arith.constant dense<0.000000e+00> : vector<8xf32>
    %43 = vector.multi_reduction <add>, %40, %cst_23 [1] : vector<8x256xf32> to vector<8xf32>
    %44 = vector.shape_cast %43 : vector<8xf32> to vector<8x1xf32>
    %45 = arith.mulf %40, %40 : vector<8x256xf32>
    %cst_24 = arith.constant dense<0.000000e+00> : vector<8xf32>
    %46 = vector.multi_reduction <add>, %45, %cst_24 [1] : vector<8x256xf32> to vector<8xf32>
    %47 = vector.shape_cast %46 : vector<8xf32> to vector<8x1xf32>
    %cst_25 = arith.constant 3.906250e-03 : f32
    %48 = vector.broadcast %cst_25 : f32 to vector<8x1xf32>
    %49 = arith.mulf %44, %48 : vector<8x1xf32>
    %cst_26 = arith.constant 3.906250e-03 : f32
    %50 = vector.broadcast %cst_26 : f32 to vector<8x1xf32>
    %51 = arith.mulf %47, %50 : vector<8x1xf32>
    %52 = arith.mulf %49, %49 : vector<8x1xf32>
    %53 = arith.subf %51, %52 : vector<8x1xf32>
    %cst_27 = arith.constant 0.000000e+00 : f32
    %54 = vector.broadcast %cst_27 : f32 to vector<8x1xf32>
    %55 = arith.maximumf %53, %54 : vector<8x1xf32>
    %cst_28 = arith.constant 9.99999974E-6 : f32
    %56 = vector.broadcast %cst_28 : f32 to vector<8x1xf32>
    %57 = arith.addf %55, %56 : vector<8x1xf32>
    %58 = math.rsqrt %57 : vector<8x1xf32>
    %59 = vector.broadcast %58 : vector<8x1xf32> to vector<8x256xf32>
    %60 = vector.broadcast %41 : vector<1x256xf32> to vector<8x256xf32>
    %61 = arith.mulf %59, %60 : vector<8x256xf32>
    %62 = arith.mulf %40, %61 : vector<8x256xf32>
    %63 = vector.broadcast %49 : vector<8x1xf32> to vector<8x256xf32>
    %64 = arith.mulf %63, %61 : vector<8x256xf32>
    %65 = vector.broadcast %42 : vector<1x256xf32> to vector<8x256xf32>
    %66 = arith.subf %65, %64 : vector<8x256xf32>
    %67 = arith.addf %62, %66 : vector<8x256xf32>
    %cst_29 = arith.constant 0.000000e+00 : f32
    %68 = vector.broadcast %cst_29 : f32 to vector<8x256xf32>
    %69 = arith.maximumf %67, %68 : vector<8x256xf32>
    %70 = arith.truncf %69 : vector<8x256xf32> to vector<8x256xbf16>
    %c0_30 = arith.constant 0 : index
    %c0_31 = arith.constant 0 : index
    %71 = vector.load %arg6[%c0_30, %c0_31] : memref<256x128xbf16, #tpu.memory_space<vmem>>, vector<256x128xbf16>
    %cst_32 = arith.constant dense<0.000000e+00> : vector<8x128xf32>
    %72 = tpu.matmul %70, %71, %cst_32 {dimension_numbers = #tpu.dot_dimension_numbers<[1], [0], [0], [1], [0, 0, 1, 1], [], []>} : vector<8x256xbf16>, vector<256x128xbf16>, vector<8x128xf32> -> vector<8x128xf32>
    %c0_33 = arith.constant 0 : index
    %c0_34 = arith.constant 0 : index
    %73 = vector.load %arg7[%c0_33, %c0_34] : memref<3x128xf32, #tpu.memory_space<vmem>>, vector<1x128xf32>
    %74 = vector.broadcast %73 : vector<1x128xf32> to vector<8x128xf32>
    %75 = arith.addf %72, %74 : vector<8x128xf32>
    %c1_35 = arith.constant 1 : index
    %c0_36 = arith.constant 0 : index
    %76 = vector.load %arg7[%c1_35, %c0_36] : memref<3x128xf32, #tpu.memory_space<vmem>>, vector<1x128xf32>
    %c2_37 = arith.constant 2 : index
    %c0_38 = arith.constant 0 : index
    %77 = vector.load %arg7[%c2_37, %c0_38] : memref<3x128xf32, #tpu.memory_space<vmem>>, vector<1x128xf32>
    %cst_39 = arith.constant dense<0.000000e+00> : vector<8xf32>
    %78 = vector.multi_reduction <add>, %75, %cst_39 [1] : vector<8x128xf32> to vector<8xf32>
    %79 = vector.shape_cast %78 : vector<8xf32> to vector<8x1xf32>
    %80 = arith.mulf %75, %75 : vector<8x128xf32>
    %cst_40 = arith.constant dense<0.000000e+00> : vector<8xf32>
    %81 = vector.multi_reduction <add>, %80, %cst_40 [1] : vector<8x128xf32> to vector<8xf32>
    %82 = vector.shape_cast %81 : vector<8xf32> to vector<8x1xf32>
    %cst_41 = arith.constant 7.812500e-03 : f32
    %83 = vector.broadcast %cst_41 : f32 to vector<8x1xf32>
    %84 = arith.mulf %79, %83 : vector<8x1xf32>
    %cst_42 = arith.constant 7.812500e-03 : f32
    %85 = vector.broadcast %cst_42 : f32 to vector<8x1xf32>
    %86 = arith.mulf %82, %85 : vector<8x1xf32>
    %87 = arith.mulf %84, %84 : vector<8x1xf32>
    %88 = arith.subf %86, %87 : vector<8x1xf32>
    %cst_43 = arith.constant 0.000000e+00 : f32
    %89 = vector.broadcast %cst_43 : f32 to vector<8x1xf32>
    %90 = arith.maximumf %88, %89 : vector<8x1xf32>
    %cst_44 = arith.constant 9.99999974E-6 : f32
    %91 = vector.broadcast %cst_44 : f32 to vector<8x1xf32>
    %92 = arith.addf %90, %91 : vector<8x1xf32>
    %93 = math.rsqrt %92 : vector<8x1xf32>
    %94 = vector.broadcast %93 : vector<8x1xf32> to vector<8x128xf32>
    %95 = vector.broadcast %76 : vector<1x128xf32> to vector<8x128xf32>
    %96 = arith.mulf %94, %95 : vector<8x128xf32>
    %97 = arith.mulf %75, %96 : vector<8x128xf32>
    %98 = vector.broadcast %84 : vector<8x1xf32> to vector<8x128xf32>
    %99 = arith.mulf %98, %96 : vector<8x128xf32>
    %100 = vector.broadcast %77 : vector<1x128xf32> to vector<8x128xf32>
    %101 = arith.subf %100, %99 : vector<8x128xf32>
    %102 = arith.addf %97, %101 : vector<8x128xf32>
    %cst_45 = arith.constant 0.000000e+00 : f32
    %103 = vector.broadcast %cst_45 : f32 to vector<8x128xf32>
    %104 = arith.maximumf %102, %103 : vector<8x128xf32>
    %105 = arith.truncf %104 : vector<8x128xf32> to vector<8x128xbf16>
    %c0_46 = arith.constant 0 : index
    %c0_47 = arith.constant 0 : index
    %106 = vector.load %arg8[%c0_46, %c0_47] : memref<128x8xbf16, #tpu.memory_space<vmem>>, vector<128x8xbf16>
    %cst_48 = arith.constant dense<0.000000e+00> : vector<8x8xf32>
    %107 = tpu.matmul %105, %106, %cst_48 {dimension_numbers = #tpu.dot_dimension_numbers<[1], [0], [0], [1], [0, 0, 1, 1], [], []>} : vector<8x128xbf16>, vector<128x8xbf16>, vector<8x8xf32> -> vector<8x8xf32>
    %c0_49 = arith.constant 0 : index
    %c0_50 = arith.constant 0 : index
    %108 = vector.load %arg9[%c0_49, %c0_50] : memref<1x8xf32, #tpu.memory_space<vmem>>, vector<1x8xf32>
    %109 = vector.broadcast %108 : vector<1x8xf32> to vector<8x8xf32>
    %110 = arith.addf %107, %109 : vector<8x8xf32>
    %111 = tpu.iota {dimensions = array<i32: 1>} : vector<8x8xi32>
    %c4_i32 = arith.constant 4 : i32
    %112 = vector.broadcast %c4_i32 : i32 to vector<8x8xi32>
    %113 = arith.cmpi slt, %111, %112 : vector<8x8xi32>
    %114 = math.tanh %110 : vector<8x8xf32>
    %cst_51 = arith.constant -4.60517025 : f32
    %cst_52 = arith.constant 0.693147182 : f32
    %115 = vector.broadcast %cst_51 : f32 to vector<8x8xf32>
    %116 = arith.maximumf %115, %110 : vector<8x8xf32>
    %117 = vector.broadcast %cst_52 : f32 to vector<8x8xf32>
    %118 = arith.minimumf %117, %116 : vector<8x8xf32>
    %119 = arith.select %113, %114, %118 : vector<8x8xi1>, vector<8x8xf32>
    %c0_53 = arith.constant 0 : index
    %c0_54 = arith.constant 0 : index
    %120 = vector.load %arg10[%c0_53, %c0_54] : memref<8x8xf32, #tpu.memory_space<vmem>>, vector<8x8xf32>
    tpu.vector_store %arg10[%c0_53, %c0_54], %119 {strides = array<i32>} : memref<8x8xf32, #tpu.memory_space<vmem>>, vector<8x8xf32>,
    return
  }
  func.func @transform_0(%arg0: i32) -> (i32, i32) {
    %c0_i32 = arith.constant 0 : i32
    %c0_i32_0 = arith.constant 0 : i32
    return %arg0, %c0_i32 : i32, i32
  }
  func.func @transform_1(%arg0: i32) -> (i32, i32) {
    %c0_i32 = arith.constant 0 : i32
    %c0_i32_0 = arith.constant 0 : i32
    %c0_i32_1 = arith.constant 0 : i32
    return %c0_i32, %c0_i32_0 : i32, i32
  }
  func.func @transform_2(%arg0: i32) -> (i32, i32) {
    %c0_i32 = arith.constant 0 : i32
    %c0_i32_0 = arith.constant 0 : i32
    %c0_i32_1 = arith.constant 0 : i32
    return %c0_i32, %c0_i32_0 : i32, i32
  }
  func.func @transform_3(%arg0: i32) -> (i32, i32) {
    %c0_i32 = arith.constant 0 : i32
    %c0_i32_0 = arith.constant 0 : i32
    %c0_i32_1 = arith.constant 0 : i32
    return %c0_i32, %c0_i32_0 : i32, i32
  }
  func.func @transform_4(%arg0: i32) -> (i32, i32) {
    %c0_i32 = arith.constant 0 : i32
    %c0_i32_0 = arith.constant 0 : i32
    %c0_i32_1 = arith.constant 0 : i32
    return %c0_i32, %c0_i32_0 : i32, i32
  }
  func.func @transform_5(%arg0: i32) -> (i32, i32) {
    %c0_i32 = arith.constant 0 : i32
    %c0_i32_0 = arith.constant 0 : i32
    %c0_i32_1 = arith.constant 0 : i32
    return %c0_i32, %c0_i32_0 : i32, i32
  }
  func.func @transform_6(%arg0: i32) -> (i32, i32) {
    %c0_i32 = arith.constant 0 : i32
    %c0_i32_0 = arith.constant 0 : i32
    %c0_i32_1 = arith.constant 0 : i32
    return %c0_i32, %c0_i32_0 : i32, i32
  }
  func.func @transform_7(%arg0: i32) -> (i32, i32) {
    %c0_i32 = arith.constant 0 : i32
    %c0_i32_0 = arith.constant 0 : i32
    %c0_i32_1 = arith.constant 0 : i32
    return %c0_i32, %c0_i32_0 : i32, i32
  }
  func.func @transform_8(%arg0: i32) -> (i32, i32) {
    %c0_i32 = arith.constant 0 : i32
    %c0_i32_0 = arith.constant 0 : i32
    %c0_i32_1 = arith.constant 0 : i32
    return %c0_i32, %c0_i32_0 : i32, i32
  }
  func.func @transform_9(%arg0: i32) -> (i32, i32) {
    %c0_i32 = arith.constant 0 : i32
    %c0_i32_0 = arith.constant 0 : i32
    return %arg0, %c0_i32 : i32, i32
  }
}

</mosaic_0001>

<llo_original>
// kernel: continuous_policy_forward.1
$region0: #{continuous_policy_forward.1}
  #allocation0 [shape = 'u32[]', space=smem, size = 0x4, offset = 0x4, fixed_abs, tag = 'smem constant byte address 0x4 - core index']
  #allocation1 [shape = 'u32[144,128]{1,0:T(1,128)}', space=vmem, size = 0x12000, scoped, tag = 'internal scratch']
  %s0 = inlined_call_operand.vmem [shape: bf16[8,64], index: 0, kind: input, shape index: {}]
  %s1 = inlined_call_operand.vmem [shape: bf16[64,256], index: 1, kind: input, shape index: {}]
  %s2 = inlined_call_operand.vmem [shape: f32[3,256], index: 2, kind: input, shape index: {}]
  %s3 = inlined_call_operand.vmem [shape: bf16[256,256], index: 3, kind: input, shape index: {}]
  %s4 = inlined_call_operand.vmem [shape: f32[3,256], index: 4, kind: input, shape index: {}]
  %s5 = inlined_call_operand.vmem [shape: bf16[256,128], index: 5, kind: input, shape index: {}]
  %s6 = inlined_call_operand.vmem [shape: f32[3,128], index: 6, kind: input, shape index: {}]
  %s7 = inlined_call_operand.vmem [shape: bf16[128,8], index: 7, kind: input, shape index: {}]
  %s8 = inlined_call_operand.vmem [shape: f32[1,8], index: 8, kind: input, shape index: {}]
  %s9 = inlined_call_operand.vmem [shape: f32[8,8], index: 9, kind: output, shape index: {}]
  %s10 = sld [smem:[#allocation0]]
  $region46: #{continuous_policy_forward.1} parent=0
    _
  %s12 = ssub.s32 1, %s10
  %s13 = scalar_select 0, %s12, %s10
  // Predicated region
  $region2: #{continuous_policy_forward.1} parent=0 // pred_check
    _
  $region3: #{continuous_policy_forward.1} parent=0 // pred_check_branch
    %15 = sbr.rel (0) target = $region5
  $region4: #{continuous_policy_forward.1} parent=0 // pred_region
    _
  $region5: #{continuous_policy_forward.1} parent=0 // pred_fallthru
    _
  // Predicated region
  $region6: #{continuous_policy_forward.1} parent=0 // pred_check
    _
  $region7: #{continuous_policy_forward.1} parent=0 // pred_check_branch
    %17 = sbr.rel (0) target = $region9
  $region8: #{continuous_policy_forward.1} parent=0 // pred_region
    _
  $region9: #{continuous_policy_forward.1} parent=0 // pred_fallthru
    _
  // Predicated region
  $region10: #{continuous_policy_forward.1} parent=0 // pred_check
    _
  $region11: #{continuous_policy_forward.1} parent=0 // pred_check_branch
    %19 = sbr.rel (0) target = $region13
  $region12: #{continuous_policy_forward.1} parent=0 // pred_region
    _
  $region13: #{continuous_policy_forward.1} parent=0 // pred_fallthru
    _
  // Predicated region
  $region14: #{continuous_policy_forward.1} parent=0 // pred_check
    _
  $region15: #{continuous_policy_forward.1} parent=0 // pred_check_branch
    %21 = sbr.rel (0) target = $region17
  $region16: #{continuous_policy_forward.1} parent=0 // pred_region
    _
  $region17: #{continuous_policy_forward.1} parent=0 // pred_fallthru
    _
  // Predicated region
  $region18: #{continuous_policy_forward.1} parent=0 // pred_check
    _
  $region19: #{continuous_policy_forward.1} parent=0 // pred_check_branch
    %23 = sbr.rel (0) target = $region21
  $region20: #{continuous_policy_forward.1} parent=0 // pred_region
    _
  $region21: #{continuous_policy_forward.1} parent=0 // pred_fallthru
    _
  // Predicated region
  $region22: #{continuous_policy_forward.1} parent=0 // pred_check
    _
  $region23: #{continuous_policy_forward.1} parent=0 // pred_check_branch
    %25 = sbr.rel (0) target = $region25
  $region24: #{continuous_policy_forward.1} parent=0 // pred_region
    _
  $region25: #{continuous_policy_forward.1} parent=0 // pred_fallthru
    _
  // Predicated region
  $region26: #{continuous_policy_forward.1} parent=0 // pred_check
    _
  $region27: #{continuous_policy_forward.1} parent=0 // pred_check_branch
    %27 = sbr.rel (0) target = $region29
  $region28: #{continuous_policy_forward.1} parent=0 // pred_region
    _
  $region29: #{continuous_policy_forward.1} parent=0 // pred_fallthru
    _
  // Predicated region
  $region30: #{continuous_policy_forward.1} parent=0 // pred_check
    _
  $region31: #{continuous_policy_forward.1} parent=0 // pred_check_branch
    %29 = sbr.rel (0) target = $region33
  $region32: #{continuous_policy_forward.1} parent=0 // pred_region
    _
  $region33: #{continuous_policy_forward.1} parent=0 // pred_fallthru
    _
  // Predicated region
  $region34: #{continuous_policy_forward.1} parent=0 // pred_check
    _
  $region35: #{continuous_policy_forward.1} parent=0 // pred_check_branch
    %31 = sbr.rel (0) target = $region37
  $region36: #{continuous_policy_forward.1} parent=0 // pred_region
    _
  $region37: #{continuous_policy_forward.1} parent=0 // pred_fallthru
    _
  %v33 = vld [vmem:[%s0] sm:$0xf]
  %v34 = vld [vmem:[%s1] sm:$0xff]
  %v35 = vld [vmem:[%s1 + $0x8] sm:$0xff]
  %v36 = vld [vmem:[%s1 + $0x10] sm:$0xff]
  %v37 = vld [vmem:[%s1 + $0x18] sm:$0xff]
  %v38 = vld [vmem:[%s1 + $0x20] sm:$0xff]
  %v39 = vld [vmem:[%s1 + $0x28] sm:$0xff]
  %v40 = vld [vmem:[%s1 + $0x30] sm:$0xff]
  %v41 = vld [vmem:[%s1 + $0x38] sm:$0xff]
  %v42 = vld [vmem:[%s2] ss:$4 sm:$0x3]
  %v44 = vlaneseq
  %v45 = vshrl.u32 %v44, 7
  %v46 = vsub.s32 0, %v45
  %v47 = vrot.slane %v42, %v46
  %v48 = vlaneseq
  %v49 = vshrl.u32 %v48, 7
  %v50 = vsub.s32 1, %v49
  %v51 = vrot.slane %v42, %v50
  %v62 = vunpack.c.l.b16 %v34
  %v63 = vunpack.c.h.b16 %v34
  %v64 = vunpack.c.l.b16 %v35
  %v65 = vunpack.c.h.b16 %v35
  %v66 = vunpack.c.l.b16 %v36
  %v67 = vunpack.c.h.b16 %v36
  %v68 = vunpack.c.l.b16 %v37
  %v69 = vunpack.c.h.b16 %v37
  %v70 = vunpack.c.l.b16 %v38
  %v71 = vunpack.c.h.b16 %v38
  %v72 = vunpack.c.l.b16 %v39
  %v73 = vunpack.c.h.b16 %v39
  %v74 = vunpack.c.l.b16 %v40
  %v75 = vunpack.c.h.b16 %v40
  %v76 = vunpack.c.l.b16 %v41
  %v77 = vunpack.c.h.b16 %v41
  %v78 = vpack.c.b16 %v64, %v62
  %v79 = vpack.c.b16 %v65, %v63
  %v80 = vpack.c.b16 %v68, %v66
  %v81 = vpack.c.b16 %v69, %v67
  %v82 = vpack.c.b16 %v72, %v70
  %v83 = vpack.c.b16 %v73, %v71
  %v84 = vpack.c.b16 %v76, %v74
  %v85 = vpack.c.b16 %v77, %v75
  %vm94 = vcmask 523264
  %v96 = vsel %vm94, %v33, 0
  %98 = vmatprep.subr.bf16.mxu0 %v79
  %99 = vmatpush1.bf16.msra.mxu0 %v78
  %100 = vmatprep.subr.bf16.mxu0 %v81
  %101 = vmatpush1.bf16.msra.mxu0 %v80
  %102 = vmatprep.subr.bf16.mxu0 %v83
  %103 = vmatpush1.bf16.msra.mxu0 %v82
  %104 = vmatprep.subr.bf16.mxu0 %v85
  %105 = vmatpush1.bf16.msra.mxu0 %v84
  %106 = vmatprep.subr.bf16.mxu0 0
  %107 = vmatpush1.bf16.msra.mxu0 0
  %108 = vmatprep.subr.bf16.mxu0 0
  %109 = vmatpush1.bf16.msra.mxu0 0
  %110 = vmatprep.subr.bf16.mxu0 0
  %111 = vmatpush1.bf16.msra.mxu0 0
  %112 = vmatprep.subr.bf16.mxu0 0
  %113 = vmatpush1.bf16.msra.mxu0 0
  %114 = vmatprep.subr.bf16.mxu0 0
  %115 = vmatpush1.bf16.msra.mxu0 0
  %116 = vmatprep.subr.bf16.mxu0 0
  %117 = vmatpush1.bf16.msra.mxu0 0
  %118 = vmatprep.subr.bf16.mxu0 0
  %119 = vmatpush1.bf16.msra.mxu0 0
  %120 = vmatprep.subr.bf16.mxu0 0
  %121 = vmatpush1.bf16.msra.mxu0 0
  %122 = vmatprep.subr.bf16.mxu0 0
  %123 = vmatpush1.bf16.msra.mxu0 0
  %124 = vmatprep.subr.bf16.mxu0 0
  %125 = vmatpush1.bf16.msra.mxu0 0
  %126 = vmatprep.subr.bf16.mxu0 0
  %127 = vmatpush1.bf16.msra.mxu0 0
  %128 = vmatprep.subr.bf16.mxu0 0
  %129 = vmatpush1.bf16.msra.mxu0 0
  %130 = vmatprep.mubr.bf16.mxu0 0
  %131 = vmatmul.mubr.bf16.gmra.mrb[0].mxu0 %v96
  %v132 = vpop.f32.mrb[0].mxu0
  %v133 = vadd.f32 %v47, %v132
  %v134 = vpop.f32.mrb[0].mxu0
  %v135 = vadd.f32 %v51, %v134
  %v136 = vpop.f32.mrb[0].mxu0
  %v137 = vpop.f32.mrb[0].mxu0
  %138 = vdwg.mxu0
  %s139 = scalar_lea.vmem %s2, 1
  %v140 = vld [vmem:[%s139] ss:$4 sm:$0x3]
  %s141 = scalar_lea.vmem %s2, 2
  %v142 = vld [vmem:[%s141] ss:$4 sm:$0x3]
  %v143 = vadd.f32 %v133, %v135
  %144 = vadd.xlane.f32.xlu0 %v143
  %v145 = vpop.xlane.xlu0 %144
  %v146 = vmul.f32 %v133, %v133
  %v147 = vmul.f32 %v135, %v135
  %v148 = vadd.f32 %v146, %v147
  %149 = vadd.xlane.f32.xlu0 %v148
  %v150 = vpop.xlane.xlu0 %149
  %v151 = vmul.f32 %v145, 0.00390625
  %v152 = vmul.f32 %v150, 0.00390625
  %v153 = vmul.f32 %v151, %v151
  %v154 = vsub.f32 %v152, %v153
  %v155 = vmax.f32 %v154, 0.0
  %v156 = vadd.f32 %v155, 1e-05
  %v157 = vrsqrt.pop %v156
  %v159 = vlaneseq
  %v160 = vshrl.u32 %v159, 7
  %v161 = vsub.s32 0, %v160
  %v162 = vrot.slane %v140, %v161
  %v163 = vlaneseq
  %v164 = vshrl.u32 %v163, 7
  %v165 = vsub.s32 1, %v164
  %v166 = vrot.slane %v140, %v165
  %v169 = vmul.f32 %v157, %v162
  %v170 = vmul.f32 %v157, %v166
  %v171 = vmul.f32 %v133, %v169
  %v172 = vmul.f32 %v135, %v170
  %v173 = vmul.f32 %v151, %v169
  %v174 = vmul.f32 %v151, %v170
  %v176 = vlaneseq
  %v177 = vshrl.u32 %v176, 7
  %v178 = vsub.s32 0, %v177
  %v179 = vrot.slane %v142, %v178
  %v180 = vlaneseq
  %v181 = vshrl.u32 %v180, 7
  %v182 = vsub.s32 1, %v181
  %v183 = vrot.slane %v142, %v182
  %v186 = vsub.f32 %v179, %v173
  %v187 = vsub.f32 %v183, %v174
  %v188 = vadd.f32 %v171, %v186
  %v189 = vadd.f32 %v172, %v187
  %v190 = vmax.f32 %v188, 0.0
  %v191 = vmax.f32 %v189, 0.0
  %v192 = vpack.c.bf16 %v190, %v190
  %v193 = vpack.c.bf16 %v191, %v191
  %v194 = vld [vmem:[%s3] sm:$0xff]
  %v195 = vld [vmem:[%s3 + $0x8] sm:$0xff]
  %v196 = vld [vmem:[%s3 + $0x10] sm:$0xff]
  %v197 = vld [vmem:[%s3 + $0x18] sm:$0xff]
  %v198 = vld [vmem:[%s3 + $0x20] sm:$0xff]
  %v199 = vld [vmem:[%s3 + $0x28] sm:$0xff]
  %v200 = vld [vmem:[%s3 + $0x30] sm:$0xff]
  %v201 = vld [vmem:[%s3 + $0x38] sm:$0xff]
  %v202 = vld [vmem:[%s3 + $0x40] sm:$0xff]
  %v203 = vld [vmem:[%s3 + $0x48] sm:$0xff]
  %v204 = vld [vmem:[%s3 + $0x50] sm:$0xff]
  %v205 = vld [vmem:[%s3 + $0x58] sm:$0xff]
  %v206 = vld [vmem:[%s3 + $0x60] sm:$0xff]
  %v207 = vld [vmem:[%s3 + $0x68] sm:$0xff]
  %v208 = vld [vmem:[%s3 + $0x70] sm:$0xff]
  %v209 = vld [vmem:[%s3 + $0x78] sm:$0xff]
  %v210 = vld [vmem:[%s3 + $0x80] sm:$0xff]
  %v211 = vld [vmem:[%s3 + $0x88] sm:$0xff]
  %v212 = vld [vmem:[%s3 + $0x90] sm:$0xff]
  %v213 = vld [vmem:[%s3 + $0x98] sm:$0xff]
  %v214 = vld [vmem:[%s3 + $0xa0] sm:$0xff]
  %v215 = vld [vmem:[%s3 + $0xa8] sm:$0xff]
  %v216 = vld [vmem:[%s3 + $0xb0] sm:$0xff]
  %v217 = vld [vmem:[%s3 + $0xb8] sm:$0xff]
  %v218 = vld [vmem:[%s3 + $0xc0] sm:$0xff]
  %v219 = vld [vmem:[%s3 + $0xc8] sm:$0xff]
  %v220 = vld [vmem:[%s3 + $0xd0] sm:$0xff]
  %v221 = vld [vmem:[%s3 + $0xd8] sm:$0xff]
  %v222 = vld [vmem:[%s3 + $0xe0] sm:$0xff]
  %v223 = vld [vmem:[%s3 + $0xe8] sm:$0xff]
  %v224 = vld [vmem:[%s3 + $0xf0] sm:$0xff]
  %v225 = vld [vmem:[%s3 + $0xf8] sm:$0xff]
  %v226 = vld [vmem:[%s4] ss:$4 sm:$0x3]
  %v228 = vlaneseq
  %v229 = vshrl.u32 %v228, 7
  %v230 = vsub.s32 0, %v229
  %v231 = vrot.slane %v226, %v230
  %v232 = vlaneseq
  %v233 = vshrl.u32 %v232, 7
  %v234 = vsub.s32 1, %v233
  %v235 = vrot.slane %v226, %v234
  %v270 = vunpack.c.l.b16 %v194
  %v271 = vunpack.c.h.b16 %v194
  %v272 = vunpack.c.l.b16 %v195
  %v273 = vunpack.c.h.b16 %v195
  %v274 = vunpack.c.l.b16 %v196
  %v275 = vunpack.c.h.b16 %v196
  %v276 = vunpack.c.l.b16 %v197
  %v277 = vunpack.c.h.b16 %v197
  %v278 = vunpack.c.l.b16 %v198
  %v279 = vunpack.c.h.b16 %v198
  %v280 = vunpack.c.l.b16 %v199
  %v281 = vunpack.c.h.b16 %v199
  %v282 = vunpack.c.l.b16 %v200
  %v283 = vunpack.c.h.b16 %v200
  %v284 = vunpack.c.l.b16 %v201
  %v285 = vunpack.c.h.b16 %v201
  %v286 = vunpack.c.l.b16 %v202
  %v287 = vunpack.c.h.b16 %v202
  %v288 = vunpack.c.l.b16 %v203
  %v289 = vunpack.c.h.b16 %v203
  %v290 = vunpack.c.l.b16 %v204
  %v291 = vunpack.c.h.b16 %v204
  %v292 = vunpack.c.l.b16 %v205
  %v293 = vunpack.c.h.b16 %v205
  %v294 = vunpack.c.l.b16 %v206
  %v295 = vunpack.c.h.b16 %v206
  %v296 = vunpack.c.l.b16 %v207
  %v297 = vunpack.c.h.b16 %v207
  %v298 = vunpack.c.l.b16 %v208
  %v299 = vunpack.c.h.b16 %v208
  %v300 = vunpack.c.l.b16 %v209
  %v301 = vunpack.c.h.b16 %v209
  %v302 = vunpack.c.l.b16 %v210
  %v303 = vunpack.c.h.b16 %v210
  %v304 = vunpack.c.l.b16 %v211
  %v305 = vunpack.c.h.b16 %v211
  %v306 = vunpack.c.l.b16 %v212
  %v307 = vunpack.c.h.b16 %v212
  %v308 = vunpack.c.l.b16 %v213
  %v309 = vunpack.c.h.b16 %v213
  %v310 = vunpack.c.l.b16 %v214
  %v311 = vunpack.c.h.b16 %v214
  %v312 = vunpack.c.l.b16 %v215
  %v313 = vunpack.c.h.b16 %v215
  %v314 = vunpack.c.l.b16 %v216
  %v315 = vunpack.c.h.b16 %v216
  %v316 = vunpack.c.l.b16 %v217
  %v317 = vunpack.c.h.b16 %v217
  %v318 = vunpack.c.l.b16 %v218
  %v319 = vunpack.c.h.b16 %v218
  %v320 = vunpack.c.l.b16 %v219
  %v321 = vunpack.c.h.b16 %v219
  %v322 = vunpack.c.l.b16 %v220
  %v323 = vunpack.c.h.b16 %v220
  %v324 = vunpack.c.l.b16 %v221
  %v325 = vunpack.c.h.b16 %v221
  %v326 = vunpack.c.l.b16 %v222
  %v327 = vunpack.c.h.b16 %v222
  %v328 = vunpack.c.l.b16 %v223
  %v329 = vunpack.c.h.b16 %v223
  %v330 = vunpack.c.l.b16 %v224
  %v331 = vunpack.c.h.b16 %v224
  %v332 = vunpack.c.l.b16 %v225
  %v333 = vunpack.c.h.b16 %v225
  %v334 = vpack.c.b16 %v272, %v270
  %v335 = vpack.c.b16 %v273, %v271
  %v336 = vpack.c.b16 %v276, %v274
  %v337 = vpack.c.b16 %v277, %v275
  %v338 = vpack.c.b16 %v280, %v278
  %v339 = vpack.c.b16 %v281, %v279
  %v340 = vpack.c.b16 %v284, %v282
  %v341 = vpack.c.b16 %v285, %v283
  %v342 = vpack.c.b16 %v288, %v286
  %v343 = vpack.c.b16 %v289, %v287
  %v344 = vpack.c.b16 %v292, %v290
  %v345 = vpack.c.b16 %v293, %v291
  %v346 = vpack.c.b16 %v296, %v294
  %v347 = vpack.c.b16 %v297, %v295
  %v348 = vpack.c.b16 %v300, %v298
  %v349 = vpack.c.b16 %v301, %v299
  %v350 = vpack.c.b16 %v304, %v302
  %v351 = vpack.c.b16 %v305, %v303
  %v352 = vpack.c.b16 %v308, %v306
  %v353 = vpack.c.b16 %v309, %v307
  %v354 = vpack.c.b16 %v312, %v310
  %v355 = vpack.c.b16 %v313, %v311
  %v356 = vpack.c.b16 %v316, %v314
  %v357 = vpack.c.b16 %v317, %v315
  %v358 = vpack.c.b16 %v320, %v318
  %v359 = vpack.c.b16 %v321, %v319
  %v360 = vpack.c.b16 %v324, %v322
  %v361 = vpack.c.b16 %v325, %v323
  %v362 = vpack.c.b16 %v328, %v326
  %v363 = vpack.c.b16 %v329, %v327
  %v364 = vpack.c.b16 %v332, %v330
  %v365 = vpack.c.b16 %v333, %v331
  %398 = vmatprep.subr.bf16.mxu0 %v335
  %399 = vmatpush1.bf16.msra.mxu0 %v334
  %400 = vmatprep.subr.bf16.mxu0 %v337
  %401 = vmatpush1.bf16.msra.mxu0 %v336
  %402 = vmatprep.subr.bf16.mxu0 %v339
  %403 = vmatpush1.bf16.msra.mxu0 %v338
  %404 = vmatprep.subr.bf16.mxu0 %v341
  %405 = vmatpush1.bf16.msra.mxu0 %v340
  %406 = vmatprep.subr.bf16.mxu0 %v343
  %407 = vmatpush1.bf16.msra.mxu0 %v342
  %408 = vmatprep.subr.bf16.mxu0 %v345
  %409 = vmatpush1.bf16.msra.mxu0 %v344
  %410 = vmatprep.subr.bf16.mxu0 %v347
  %411 = vmatpush1.bf16.msra.mxu0 %v346
  %412 = vmatprep.subr.bf16.mxu0 %v349
  %413 = vmatpush1.bf16.msra.mxu0 %v348
  %414 = vmatprep.subr.bf16.mxu0 %v351
  %415 = vmatpush1.bf16.msra.mxu0 %v350
  %416 = vmatprep.subr.bf16.mxu0 %v353
  %417 = vmatpush1.bf16.msra.mxu0 %v352
  %418 = vmatprep.subr.bf16.mxu0 %v355
  %419 = vmatpush1.bf16.msra.mxu0 %v354
  %420 = vmatprep.subr.bf16.mxu0 %v357
  %421 = vmatpush1.bf16.msra.mxu0 %v356
  %422 = vmatprep.subr.bf16.mxu0 %v359
  %423 = vmatpush1.bf16.msra.mxu0 %v358
  %424 = vmatprep.subr.bf16.mxu0 %v361
  %425 = vmatpush1.bf16.msra.mxu0 %v360
  %426 = vmatprep.subr.bf16.mxu0 %v363
  %427 = vmatpush1.bf16.msra.mxu0 %v362
  %428 = vmatprep.subr.bf16.mxu0 %v365
  %429 = vmatpush1.bf16.msra.mxu0 %v364
  %430 = vmatprep.mubr.bf16.mxu0 %v193
  %431 = vmatmul.mubr.bf16.gmra.mrb[0].mxu0 %v192
  %v432 = vpop.f32.mrb[0].mxu0
  %v433 = vadd.f32 %v231, %v432
  %v434 = vpop.f32.mrb[0].mxu0
  %v435 = vadd.f32 %v235, %v434
  %v436 = vpop.f32.mrb[0].mxu0
  %v437 = vpop.f32.mrb[0].mxu0
  %438 = vdwg.mxu0
  %s439 = scalar_lea.vmem %s4, 1
  %v440 = vld [vmem:[%s439] ss:$4 sm:$0x3]
  %s441 = scalar_lea.vmem %s4, 2
  %v442 = vld [vmem:[%s441] ss:$4 sm:$0x3]
  %v443 = vadd.f32 %v433, %v435
  %444 = vadd.xlane.f32.xlu0 %v443
  %v445 = vpop.xlane.xlu0 %444
  %v446 = vmul.f32 %v433, %v433
  %v447 = vmul.f32 %v435, %v435
  %v448 = vadd.f32 %v446, %v447
  %449 = vadd.xlane.f32.xlu0 %v448
  %v450 = vpop.xlane.xlu0 %449
  %v451 = vmul.f32 %v445, 0.00390625
  %v452 = vmul.f32 %v450, 0.00390625
  %v453 = vmul.f32 %v451, %v451
  %v454 = vsub.f32 %v452, %v453
  %v455 = vmax.f32 %v454, 0.0
  %v456 = vadd.f32 %v455, 1e-05
  %v457 = vrsqrt.pop %v456
  %v459 = vlaneseq
  %v460 = vshrl.u32 %v459, 7
  %v461 = vsub.s32 0, %v460
  %v462 = vrot.slane %v440, %v461
  %v463 = vlaneseq
  %v464 = vshrl.u32 %v463, 7
  %v465 = vsub.s32 1, %v464
  %v466 = vrot.slane %v440, %v465
  %v469 = vmul.f32 %v457, %v462
  %v470 = vmul.f32 %v457, %v466
  %v471 = vmul.f32 %v433, %v469
  %v472 = vmul.f32 %v435, %v470
  %v473 = vmul.f32 %v451, %v469
  %v474 = vmul.f32 %v451, %v470
  %v476 = vlaneseq
  %v477 = vshrl.u32 %v476, 7
  %v478 = vsub.s32 0, %v477
  %v479 = vrot.slane %v442, %v478
  %v480 = vlaneseq
  %v481 = vshrl.u32 %v480, 7
  %v482 = vsub.s32 1, %v481
  %v483 = vrot.slane %v442, %v482
  %v486 = vsub.f32 %v479, %v473
  %v487 = vsub.f32 %v483, %v474
  %v488 = vadd.f32 %v471, %v486
  %v489 = vadd.f32 %v472, %v487
  %v490 = vmax.f32 %v488, 0.0
  %v491 = vmax.f32 %v489, 0.0
  %v492 = vpack.c.bf16 %v490, %v490
  %v493 = vpack.c.bf16 %v491, %v491
  %v494 = vld [vmem:[%s5] sm:$0xf]
  %v495 = vld [vmem:[%s5 + $0x4] sm:$0xf]
  %v496 = vld [vmem:[%s5 + $0x8] sm:$0xf]
  %v497 = vld [vmem:[%s5 + $0xc] sm:$0xf]
  %v498 = vld [vmem:[%s5 + $0x10] sm:$0xf]
  %v499 = vld [vmem:[%s5 + $0x14] sm:$0xf]
  %v500 = vld [vmem:[%s5 + $0x18] sm:$0xf]
  %v501 = vld [vmem:[%s5 + $0x1c] sm:$0xf]
  %v502 = vld [vmem:[%s5 + $0x20] sm:$0xf]
  %v503 = vld [vmem:[%s5 + $0x24] sm:$0xf]
  %v504 = vld [vmem:[%s5 + $0x28] sm:$0xf]
  %v505 = vld [vmem:[%s5 + $0x2c] sm:$0xf]
  %v506 = vld [vmem:[%s5 + $0x30] sm:$0xf]
  %v507 = vld [vmem:[%s5 + $0x34] sm:$0xf]
  %v508 = vld [vmem:[%s5 + $0x38] sm:$0xf]
  %v509 = vld [vmem:[%s5 + $0x3c] sm:$0xf]
  %v510 = vld [vmem:[%s5 + $0x40] sm:$0xf]
  %v511 = vld [vmem:[%s5 + $0x44] sm:$0xf]
  %v512 = vld [vmem:[%s5 + $0x48] sm:$0xf]
  %v513 = vld [vmem:[%s5 + $0x4c] sm:$0xf]
  %v514 = vld [vmem:[%s5 + $0x50] sm:$0xf]
  %v515 = vld [vmem:[%s5 + $0x54] sm:$0xf]
  %v516 = vld [vmem:[%s5 + $0x58] sm:$0xf]
  %v517 = vld [vmem:[%s5 + $0x5c] sm:$0xf]
  %v518 = vld [vmem:[%s5 + $0x60] sm:$0xf]
  %v519 = vld [vmem:[%s5 + $0x64] sm:$0xf]
  %v520 = vld [vmem:[%s5 + $0x68] sm:$0xf]
  %v521 = vld [vmem:[%s5 + $0x6c] sm:$0xf]
  %v522 = vld [vmem:[%s5 + $0x70] sm:$0xf]
  %v523 = vld [vmem:[%s5 + $0x74] sm:$0xf]
  %v524 = vld [vmem:[%s5 + $0x78] sm:$0xf]
  %v525 = vld [vmem:[%s5 + $0x7c] sm:$0xf]
  %v526 = vld [vmem:[%s6] sm:$0x1]
  %v527 = vlaneseq
  %v528 = vshrl.u32 %v527, 7
  %v529 = vsub.s32 0, %v528
  %v530 = vrot.slane %v526, %v529
  %v563 = vunpack.c.l.b16 %v494
  %v564 = vunpack.c.l.b16 %v495
  %v565 = vunpack.c.l.b16 %v496
  %v566 = vunpack.c.l.b16 %v497
  %v567 = vunpack.c.l.b16 %v498
  %v568 = vunpack.c.l.b16 %v499
  %v569 = vunpack.c.l.b16 %v500
  %v570 = vunpack.c.l.b16 %v501
  %v571 = vunpack.c.l.b16 %v502
  %v572 = vunpack.c.l.b16 %v503
  %v573 = vunpack.c.l.b16 %v504
  %v574 = vunpack.c.l.b16 %v505
  %v575 = vunpack.c.l.b16 %v506
  %v576 = vunpack.c.l.b16 %v507
  %v577 = vunpack.c.l.b16 %v508
  %v578 = vunpack.c.l.b16 %v509
  %v579 = vunpack.c.l.b16 %v510
  %v580 = vunpack.c.l.b16 %v511
  %v581 = vunpack.c.l.b16 %v512
  %v582 = vunpack.c.l.b16 %v513
  %v583 = vunpack.c.l.b16 %v514
  %v584 = vunpack.c.l.b16 %v515
  %v585 = vunpack.c.l.b16 %v516
  %v586 = vunpack.c.l.b16 %v517
  %v587 = vunpack.c.l.b16 %v518
  %v588 = vunpack.c.l.b16 %v519
  %v589 = vunpack.c.l.b16 %v520
  %v590 = vunpack.c.l.b16 %v521
  %v591 = vunpack.c.l.b16 %v522
  %v592 = vunpack.c.l.b16 %v523
  %v593 = vunpack.c.l.b16 %v524
  %v594 = vunpack.c.l.b16 %v525
  %v595 = vpack.c.b16 %v564, %v563
  %v596 = vpack.c.b16 %v566, %v565
  %v597 = vpack.c.b16 %v568, %v567
  %v598 = vpack.c.b16 %v570, %v569
  %v599 = vpack.c.b16 %v572, %v571
  %v600 = vpack.c.b16 %v574, %v573
  %v601 = vpack.c.b16 %v576, %v575
  %v602 = vpack.c.b16 %v578, %v577
  %v603 = vpack.c.b16 %v580, %v579
  %v604 = vpack.c.b16 %v582, %v581
  %v605 = vpack.c.b16 %v584, %v583
  %v606 = vpack.c.b16 %v586, %v585
  %v607 = vpack.c.b16 %v588, %v587
  %v608 = vpack.c.b16 %v590, %v589
  %v609 = vpack.c.b16 %v592, %v591
  %v610 = vpack.c.b16 %v594, %v593
  %627 = vmatprep.subr.bf16.mxu0 0
  %628 = vmatpush1.bf16.msra.mxu0 %v595
  %629 = vmatprep.subr.bf16.mxu0 0
  %630 = vmatpush1.bf16.msra.mxu0 %v596
  %631 = vmatprep.subr.bf16.mxu0 0
  %632 = vmatpush1.bf16.msra.mxu0 %v597
  %633 = vmatprep.subr.bf16.mxu0 0
  %634 = vmatpush1.bf16.msra.mxu0 %v598
  %635 = vmatprep.subr.bf16.mxu0 0
  %636 = vmatpush1.bf16.msra.mxu0 %v599
  %637 = vmatprep.subr.bf16.mxu0 0
  %638 = vmatpush1.bf16.msra.mxu0 %v600
  %639 = vmatprep.subr.bf16.mxu0 0
  %640 = vmatpush1.bf16.msra.mxu0 %v601
  %641 = vmatprep.subr.bf16.mxu0 0
  %642 = vmatpush1.bf16.msra.mxu0 %v602
  %643 = vmatprep.subr.bf16.mxu0 0
  %644 = vmatpush1.bf16.msra.mxu0 %v603
  %645 = vmatprep.subr.bf16.mxu0 0
  %646 = vmatpush1.bf16.msra.mxu0 %v604
  %647 = vmatprep.subr.bf16.mxu0 0
  %648 = vmatpush1.bf16.msra.mxu0 %v605
  %649 = vmatprep.subr.bf16.mxu0 0
  %650 = vmatpush1.bf16.msra.mxu0 %v606
  %651 = vmatprep.subr.bf16.mxu0 0
  %652 = vmatpush1.bf16.msra.mxu0 %v607
  %653 = vmatprep.subr.bf16.mxu0 0
  %654 = vmatpush1.bf16.msra.mxu0 %v608
  %655 = vmatprep.subr.bf16.mxu0 0
  %656 = vmatpush1.bf16.msra.mxu0 %v609
  %657 = vmatprep.subr.bf16.mxu0 0
  %658 = vmatpush1.bf16.msra.mxu0 %v610
  %659 = vmatprep.mubr.bf16.mxu0 %v493
  %660 = vmatmul.mubr.bf16.gmra.mrb[0].mxu0 %v492
  %v661 = vpop.f32.mrb[0].mxu0
  %v662 = vadd.f32 %v530, %v661
  %v663 = vpop.f32.mrb[0].mxu0
  %v664 = vpop.f32.mrb[0].mxu0
  %v665 = vpop.f32.mrb[0].mxu0
  %666 = vdwg.mxu0
  %v667 = vld [vmem:[%s6 + $0x1] sm:$0x1]
  %v668 = vld [vmem:[%s6 + $0x2] sm:$0x1]
  %669 = vadd.xlane.f32.xlu0 %v662
  %v670 = vpop.xlane.xlu0 %669
  %v671 = vmul.f32 %v662, %v662
  %672 = vadd.xlane.f32.xlu0 %v671
  %v673 = vpop.xlane.xlu0 %672
  %v674 = vmul.f32 %v670, 0.0078125
  %v675 = vmul.f32 %v673, 0.0078125
  %v676 = vmul.f32 %v674, %v674
  %v677 = vsub.f32 %v675, %v676
  %v678 = vmax.f32 %v677, 0.0
  %v679 = vadd.f32 %v678, 1e-05
  %v680 = vrsqrt.pop %v679
  %v681 = vlaneseq
  %v682 = vshrl.u32 %v681, 7
  %v683 = vsub.s32 0, %v682
  %v684 = vrot.slane %v667, %v683
  %v685 = vmul.f32 %v680, %v684
  %v686 = vmul.f32 %v662, %v685
  %v687 = vmul.f32 %v674, %v685
  %v688 = vlaneseq
  %v689 = vshrl.u32 %v688, 7
  %v690 = vsub.s32 0, %v689
  %v691 = vrot.slane %v668, %v690
  %v692 = vsub.f32 %v691, %v687
  %v693 = vadd.f32 %v686, %v692
  %v694 = vmax.f32 %v693, 0.0
  %v695 = vpack.c.bf16 %v694, %v694
  %v696 = vld [vmem:[%s7] sm:$0xf]
  %v697 = vld [vmem:[%s7 + $0x4] sm:$0xf]
  %v698 = vld [vmem:[%s7 + $0x8] sm:$0xf]
  %v699 = vld [vmem:[%s7 + $0xc] sm:$0xf]
  %v700 = vld [vmem:[%s7 + $0x10] sm:$0xf]
  %v701 = vld [vmem:[%s7 + $0x14] sm:$0xf]
  %v702 = vld [vmem:[%s7 + $0x18] sm:$0xf]
  %v703 = vld [vmem:[%s7 + $0x1c] sm:$0xf]
  %v704 = vld [vmem:[%s7 + $0x20] sm:$0xf]
  %v705 = vld [vmem:[%s7 + $0x24] sm:$0xf]
  %v706 = vld [vmem:[%s7 + $0x28] sm:$0xf]
  %v707 = vld [vmem:[%s7 + $0x2c] sm:$0xf]
  %v708 = vld [vmem:[%s7 + $0x30] sm:$0xf]
  %v709 = vld [vmem:[%s7 + $0x34] sm:$0xf]
  %v710 = vld [vmem:[%s7 + $0x38] sm:$0xf]
  %v711 = vld [vmem:[%s7 + $0x3c] sm:$0xf]
  %v712 = vld [vmem:[%s8] sm:$0x1]
  %v714 = vlaneseq
  %v715 = vshrl.u32 %v714, 7
  %v716 = vsub.s32 0, %v715
  %v717 = vrot.slane %v712, %v716
  %v735 = vunpack.c.l.b16 %v696
  %v736 = vunpack.c.l.b16 %v697
  %v737 = vunpack.c.l.b16 %v698
  %v738 = vunpack.c.l.b16 %v699
  %v739 = vunpack.c.l.b16 %v700
  %v740 = vunpack.c.l.b16 %v701
  %v741 = vunpack.c.l.b16 %v702
  %v742 = vunpack.c.l.b16 %v703
  %v743 = vunpack.c.l.b16 %v704
  %v744 = vunpack.c.l.b16 %v705
  %v745 = vunpack.c.l.b16 %v706
  %v746 = vunpack.c.l.b16 %v707
  %v747 = vunpack.c.l.b16 %v708
  %v748 = vunpack.c.l.b16 %v709
  %v749 = vunpack.c.l.b16 %v710
  %v750 = vunpack.c.l.b16 %v711
  %v751 = vpack.c.b16 %v736, %v735
  %v752 = vpack.c.b16 %v738, %v737
  %v753 = vpack.c.b16 %v740, %v739
  %v754 = vpack.c.b16 %v742, %v741
  %v755 = vpack.c.b16 %v744, %v743
  %v756 = vpack.c.b16 %v746, %v745
  %v757 = vpack.c.b16 %v748, %v747
  %v758 = vpack.c.b16 %v750, %v749
  %767 = vmatprep.subr.bf16.mxu0 0
  %768 = vmatpush1.bf16.msra.mxu0 %v751
  %769 = vmatprep.subr.bf16.mxu0 0
  %770 = vmatpush1.bf16.msra.mxu0 %v752
  %771 = vmatprep.subr.bf16.mxu0 0
  %772 = vmatpush1.bf16.msra.mxu0 %v753
  %773 = vmatprep.subr.bf16.mxu0 0
  %774 = vmatpush1.bf16.msra.mxu0 %v754
  %775 = vmatprep.subr.bf16.mxu0 0
  %776 = vmatpush1.bf16.msra.mxu0 %v755
  %777 = vmatprep.subr.bf16.mxu0 0
  %778 = vmatpush1.bf16.msra.mxu0 %v756
  %779 = vmatprep.subr.bf16.mxu0 0
  %780 = vmatpush1.bf16.msra.mxu0 %v757
  %781 = vmatprep.subr.bf16.mxu0 0
  %782 = vmatpush1.bf16.msra.mxu0 %v758
  %783 = vmatprep.subr.bf16.mxu0 0
  %784 = vmatpush1.bf16.msra.mxu0 0
  %785 = vmatprep.subr.bf16.mxu0 0
  %786 = vmatpush1.bf16.msra.mxu0 0
  %787 = vmatprep.subr.bf16.mxu0 0
  %788 = vmatpush1.bf16.msra.mxu0 0
  %789 = vmatprep.subr.bf16.mxu0 0
  %790 = vmatpush1.bf16.msra.mxu0 0
  %791 = vmatprep.subr.bf16.mxu0 0
  %792 = vmatpush1.bf16.msra.mxu0 0
  %793 = vmatprep.subr.bf16.mxu0 0
  %794 = vmatpush1.bf16.msra.mxu0 0
  %795 = vmatprep.subr.bf16.mxu0 0
  %796 = vmatpush1.bf16.msra.mxu0 0
  %797 = vmatprep.subr.bf16.mxu0 0
  %798 = vmatpush1.bf16.msra.mxu0 0
  %799 = vmatprep.mubr.bf16.mxu0 0
  %800 = vmatmul.mubr.bf16.gmra.mrb[0].mxu0 %v695
  %v801 = vpop.f32.mrb[0].mxu0
  %v802 = vadd.f32 %v717, %v801
  %v803 = vpop.f32.mrb[0].mxu0
  %v804 = vpop.f32.mrb[0].mxu0
  %v805 = vpop.f32.mrb[0].mxu0
  %806 = vdwg.mxu0
  %v807 = vlaneseq
  %v808 = vand.u32 %v807, 127
  %vm809 = vcmp.lt.s32.totalorder %v808, 4
  %v810 = vtanh.pop %v802
  %v811 = vmax.f32 %v802, -4.6051702
  %v812 = vmin.f32 %v811, 0.6931472
  %v813 = vsel %vm809, %v810, %v812
  %vm814 = vcmask 64512
  %815 = vst.msk [vmem:[%s9] sm:$0xff] %vm814, %v813
  // Predicated region
  $region38: #{continuous_policy_forward.1} parent=0 // pred_check
    _
  $region39: #{continuous_policy_forward.1} parent=0 // pred_check_branch
    %817 = sbr.rel (0) target = $region41
  $region40: #{continuous_policy_forward.1} parent=0 // pred_region
    _
  $region41: #{continuous_policy_forward.1} parent=0 // pred_fallthru
    _
  // Predicated region
  $region42: #{continuous_policy_forward.1} parent=0 // pred_check
    _
  $region43: #{continuous_policy_forward.1} parent=0 // pred_check_branch
    %819 = sbr.rel (0) target = $region45
  $region44: #{continuous_policy_forward.1} parent=0 // pred_region
    _
  $region45: #{continuous_policy_forward.1} parent=0 // pred_fallthru
    _

</llo_original>
